<compile_context>
chip_gen: v5e
topology: v5e:2x2
jax: 0.10.0
libtpu: 0.0.40
codegen_flags: <defaults>
</compile_context>

<pallas_src>
import functools

import jax
import jax.numpy as jnp
from jax.experimental import pallas as pl
from jax.experimental.pallas import tpu as pltpu

_LANES = 128
_MIB = 1024 * 1024
_PALLAS_MIN_BYTES = 1 * _MIB   # below this, use the jnp fallback (launch overhead)


def _round_up(x, m):
    return (x + m - 1) // m * m


def _device_tuning():
    """Return (block_bytes, vmem_limit_bytes_or_None, split_rows_for_two_cores)."""
    kind = ""
    try:
        kind = (jax.devices()[0].device_kind or "").lower()
    except Exception:
        pass
    if "v7" in kind:
        # 2 x 16 MiB pipeline buffers exceed the 32 MiB scoped-VMEM default;
        # 48 MiB leaves headroom under v7x's 64 MiB physical VMEM per TC.
        return 16 * _MIB, 48 * _MIB, True
    if "v6" in kind:
        # 2 x 8 MiB buffers fit the 32 MiB scoped default (128 MiB physical).
        return 8 * _MIB, None, False
    # v5e / unknown: 2 x 4 MiB buffers fit the 16 MiB scoped default.
    return 4 * _MIB, None, False


def _choose_tiles(nc, hw, itemsize, block_bytes, split_rows):
    """Pick (tm, tk) with the invariants:
         tm == nc (full dim)  or  tm % 128 == 0
         tk == hw (full dim)  or  tk % 128 == 0
       and tm * tk * itemsize roughly bounded by block_bytes."""
    row_bytes = hw * itemsize
    rows_fit = block_bytes // row_bytes if row_bytes > 0 else nc

    if nc <= rows_fit:
        # All full rows fit in a single block.
        if split_rows and nc > _LANES and nc * row_bytes >= 2 * _MIB:
            # v7x: keep >= 2 row blocks so the "parallel" axis spans both TCs.
            tm = _round_up(pl.cdiv(nc, 2), _LANES)
            if tm < nc:
                return tm, hw
        return nc, hw

    if rows_fit >= _LANES:
        # Tile rows only; rows stay whole so no K masking is needed.
        return (rows_fit // _LANES) * _LANES, hw

    # Rows are too long for one block: tile the reduction axis too.
    tm = nc if nc <= _LANES else _LANES
    tk = max(_LANES, (block_bytes // (tm * itemsize)) // _LANES * _LANES)
    tk = min(tk, _round_up(hw, _LANES))
    return tm, tk


def _mean_rows_kernel(x_ref, o_ref, *, inv_hw):
    """nk == 1: one (tm, HW) tile -> lane-dense (1, tm) row of means."""
    x = x_ref[...].astype(jnp.float32)                     # (tm, HW)
    means = jnp.sum(x, axis=-1, keepdims=True) * inv_hw    # (tm, 1) f32
    tm = means.shape[0]
    wide = jnp.broadcast_to(means, (tm, _LANES))           # (tm, 128)
    o_ref[...] = jnp.transpose(wide)[0:1, :].astype(o_ref.dtype)   # (1, tm)


def _mean_rows_tiled_kernel(x_ref, o_ref, acc_ref, *, inv_hw, hw, tk):
    """nk > 1: lane-wise f32 accumulation; one XLU reduce at the last K step."""
    k = pl.program_id(1)

    @pl.when(k == 0)
    def _init():
        acc_ref[...] = jnp.zeros_like(acc_ref)

    x = x_ref[...].astype(jnp.float32)                     # (tm, tk), tk % 128 == 0
    if hw % tk != 0:
        # The last K tile hangs off the array edge; zero the garbage lanes.
        valid = hw - k * tk                                # == tk except last step
        lane = jax.lax.broadcasted_iota(jnp.int32, x.shape, 1)
        x = jnp.where(lane < valid, x, 0.0)

    # Fold the tk/128 lane blocks with VALU adds; keep a (tm, 128) partial so the
    # expensive cross-lane reduce + transpose happens only once per row tile.
    partial = x[:, 0:_LANES]
    for j in range(1, tk // _LANES):
        partial = partial + x[:, j * _LANES:(j + 1) * _LANES]
    acc_ref[...] += partial

    @pl.when(k == pl.num_programs(1) - 1)
    def _finalize():
        means = jnp.sum(acc_ref[...], axis=-1, keepdims=True) * inv_hw  # (tm, 1)
        tm = means.shape[0]
        wide = jnp.broadcast_to(means, (tm, _LANES))
        o_ref[...] = jnp.transpose(wide)[0:1, :].astype(o_ref.dtype)


def _global_mean_pool_pallas(x, block_bytes=None):
    N, C, H, W = x.shape
    NC, HW = N * C, H * W
    itemsize = jnp.dtype(x.dtype).itemsize

    auto_block, vmem_limit, split_rows = _device_tuning()
    if block_bytes is None:
        block_bytes = auto_block

    tm, tk = _choose_tiles(NC, HW, itemsize, block_bytes, split_rows)
    nk = pl.cdiv(HW, tk)
    if nk == 1:
        tk = HW            # full reduction dim: no in-kernel masking needed
    nm = pl.cdiv(NC, tm)
    if nm == 1:
        tm = NC            # full row dim is always a legal block shape
    nc_out = nm * tm       # output padded to whole row blocks; sliced below

    x2 = x.reshape(NC, HW)          # free: NCHW is contiguous over (N*C, H*W)
    inv_hw = 1.0 / float(HW)

    cost = pl.CostEstimate(
        flops=NC * HW,
        transcendentals=0,
        bytes_accessed=NC * HW * itemsize + nc_out * itemsize,
    )
    compiler_params = pltpu.CompilerParams(
        dimension_semantics=("parallel",) if nk == 1 else ("parallel", "arbitrary"),
        vmem_limit_bytes=vmem_limit,
    )

    if nk == 1:
        kernel = functools.partial(_mean_rows_kernel, inv_hw=inv_hw)
        grid_spec = pltpu.PrefetchScalarGridSpec(
            num_scalar_prefetch=0,
            grid=(nm,),
            in_specs=[pl.BlockSpec((tm, tk), lambda i: (i, 0))],
            out_specs=pl.BlockSpec((1, tm), lambda i: (0, i)),
        )
    else:
        kernel = functools.partial(
            _mean_rows_tiled_kernel, inv_hw=inv_hw, hw=HW, tk=tk)
        grid_spec = pltpu.PrefetchScalarGridSpec(
            num_scalar_prefetch=0,
            grid=(nm, nk),                                  # reduction axis last
            in_specs=[pl.BlockSpec((tm, tk), lambda i, k: (i, k))],
            out_specs=pl.BlockSpec((1, tm), lambda i, k: (0, i)),
            scratch_shapes=[pltpu.VMEM((tm, _LANES), jnp.float32)],
        )

    out = pl.pallas_call(
        kernel,
        out_shape=jax.ShapeDtypeStruct((1, nc_out), x.dtype),
        grid_spec=grid_spec,
        compiler_params=compiler_params,
        cost_estimate=cost,
    )(x2)
    return out[0, :NC].reshape(N, C)


def expression_forward(x, *, block_bytes=None, force_pallas=False):
    """Expression(lambda u: u.mean(dim=[2, 3])) for an NCHW input."""
    N, C, H, W = x.shape
    nbytes = N * C * H * W * jnp.dtype(x.dtype).itemsize
    if not force_pallas and nbytes < _PALLAS_MIN_BYTES:
        # TODO(synk): in InstaAug's CNN head this reduce should really be fused
        # into the producing conv's epilogue; for tiny activations a standalone
        # pallas_call is pure launch overhead, so use XLA's fused mean instead.
        return jnp.mean(x, axis=(2, 3))
    return _global_mean_pool_pallas(x, block_bytes=block_bytes)


if __name__ == "__main__":
    key = jax.random.PRNGKey(0)
    k0, k1, k2, k3, k4 = jax.random.split(key, 5)

    # 1) Small NCHW input consistent with the CNN head (single-block path).
    x = jax.random.normal(k0, (2, 4, 16, 16), dtype=jnp.float32)
    y = jax.block_until_ready(expression_forward(x, force_pallas=True))
    assert y.shape == (2, 4), y.shape
    assert jnp.allclose(y, jnp.mean(x, axis=(2, 3)), atol=1e-4, rtol=1e-4)

    # 2) Larger spatial size, still the single-K-step path.
    x2 = jax.random.normal(k1, (2, 8, 48, 48), dtype=jnp.float32)
    y2 = jax.block_until_ready(expression_forward(x2, force_pallas=True))
    assert y2.shape == (2, 8), y2.shape
    assert jnp.allclose(y2, jnp.mean(x2, axis=(2, 3)), atol=1e-4, rtol=1e-4)

    # 3) Tiled-K path with a non-dividing last K tile (in-kernel lane mask),
    #    forced by shrinking the per-block byte budget.
    x3 = jax.random.normal(k2, (2, 4, 24, 24), dtype=jnp.float32)
    y3 = jax.block_until_ready(
        expression_forward(x3, force_pallas=True, block_bytes=8 * 1024))
    assert jnp.allclose(y3, jnp.mean(x3, axis=(2, 3)), atol=1e-4, rtol=1e-4)

    # 4) Multiple row blocks (nm > 1) with a non-dividing row dimension
    #    (last row block hangs off the edge; garbage rows are sliced away).
    x4 = jax.random.normal(k3, (2, 96, 8, 8), dtype=jnp.float32)
    y4 = jax.block_until_ready(
        expression_forward(x4, force_pallas=True, block_bytes=4 * 1024))
    assert jnp.allclose(y4, jnp.mean(x4, axis=(2, 3)), atol=1e-4, rtol=1e-4)

    # 5) bf16 input (row blocks are full-dim or 128-multiples, so packing is safe).
    x5 = jax.random.normal(k4, (2, 8, 16, 16), dtype=jnp.bfloat16)
    y5 = jax.block_until_ready(expression_forward(x5, force_pallas=True))
    assert jnp.allclose(y5.astype(jnp.float32),
                        jnp.mean(x5.astype(jnp.float32), axis=(2, 3)),
                        atol=2e-2, rtol=2e-2)

    # 6) Tiny-activation fallback path (no pallas launch).
    y6 = jax.block_until_ready(expression_forward(x))
    assert jnp.allclose(y6, jnp.mean(x, axis=(2, 3)), atol=1e-5, rtol=1e-5)

    print("KERNEL_OK")
</pallas_src>

<mosaic_0001>
module attributes {stable_mosaic.version = 11 : i64} {
  func.func @_mean_rows_kernel(%arg0: i32, %arg1: memref<8x256xf32, #tpu.memory_space<vmem>>, %arg2: memref<1x8xf32, #tpu.memory_space<vmem>>) attributes {dimension_semantics = [#tpu.dimension_semantics<parallel>], iteration_bounds = array<i64: 1>, scalar_prefetch = 0 : i64, scratch_operands = 0 : i64, tpu.core_type = #tpu.core_type<tc>, window_params = [{transform_indices = @transform_0, window_bounds = array<i64: 8, 256>}, {transform_indices = @transform_1, window_bounds = array<i64: 1, 8>}]} {
    %c0 = arith.constant 0 : index
    %c0_0 = arith.constant 0 : index
    %0 = vector.load %arg1[%c0, %c0_0] : memref<8x256xf32, #tpu.memory_space<vmem>>, vector<8x256xf32>
    %cst = arith.constant dense<0.000000e+00> : vector<8xf32>
    %1 = vector.multi_reduction <add>, %0, %cst [1] : vector<8x256xf32> to vector<8xf32>
    %2 = vector.shape_cast %1 : vector<8xf32> to vector<8x1xf32>
    %cst_1 = arith.constant 3.906250e-03 : f32
    %3 = vector.broadcast %cst_1 : f32 to vector<8x1xf32>
    %4 = arith.mulf %2, %3 : vector<8x1xf32>
    %5 = vector.shape_cast %4 : vector<8x1xf32> to vector<8x1xf32>
    %6 = vector.broadcast %5 : vector<8x1xf32> to vector<8x128xf32>
    %7 = tpu.transpose %6, [1, 0] : vector<8x128xf32> -> vector<128x8xf32>
    %8 = vector.extract_strided_slice %7 {offsets = [0, 0], sizes = [1, 8], strides = [1, 1]} : vector<128x8xf32> to vector<1x8xf32>
    %c0_2 = arith.constant 0 : index
    %c0_3 = arith.constant 0 : index
    %9 = vector.load %arg2[%c0_2, %c0_3] : memref<1x8xf32, #tpu.memory_space<vmem>>, vector<1x8xf32>
    tpu.vector_store %arg2[%c0_2, %c0_3], %8 {strides = array<i32>} : memref<1x8xf32, #tpu.memory_space<vmem>>, vector<1x8xf32>,
    return
  }
  func.func @transform_0(%arg0: i32) -> (i32, i32) {
    %c0_i32 = arith.constant 0 : i32
    %c0_i32_0 = arith.constant 0 : i32
    return %arg0, %c0_i32 : i32, i32
  }
  func.func @transform_1(%arg0: i32) -> (i32, i32) {
    %c0_i32 = arith.constant 0 : i32
    %c0_i32_0 = arith.constant 0 : i32
    return %c0_i32, %arg0 : i32, i32
  }
}

</mosaic_0001>

<llo_original>
// kernel: tpu_custom_call.1
$region0: #{tpu_custom_call.1}
  #allocation0 [shape = 'u32[]', space=smem, size = 0x4, offset = 0x4, fixed_abs, tag = 'smem constant byte address 0x4 - core index']
  #allocation1 [shape = 'u32[72,128]{1,0:T(1,128)}', space=vmem, size = 0x9000, scoped, tag = 'internal scratch']
  %s0 = inlined_call_operand.hbm [shape: f32[8,256], index: 0, kind: input, shape index: {}]
  %s1 = inlined_call_operand.hbm [shape: f32[1,8], index: 1, kind: output, shape index: {}]
  %s2 = sld [smem:[#allocation0]]
  $region18: #{tpu_custom_call.1} parent=0
    _
  %s4 = ssub.s32 1, %s2
  %s5 = scalar_select 0, %s4, %s2
  $region1: #{tpu_custom_call.1} parent=0
    #allocation2 [shape = 'u8[8192]{0}', space=vmem, size = 0x2000, scoped, tag = 'input window, operand 0, single buffered']
    #allocation3 [shape = 's32[1]{0}', space=sflag, size = 0x4, scoped, tag = 'scoped memory for tpu_custom_call.1']
    #allocation4 [shape = 's32[1]{0}', space=sflag, size = 0x4, scoped, tag = 'scoped memory for tpu_custom_call.1']
    #allocation5 [shape = 'u8[512]{0}', space=vmem, size = 0x400, scoped, tag = 'output window, operand 0, single buffered']
    %6 = vsyncpa [#allocation3], 0
    %7 = vsyncpa [#allocation4], 0
    // Predicated region
    $region2: #{tpu_custom_call.1} parent=1 // pred_check
      _
    $region3: #{tpu_custom_call.1} parent=1 // pred_check_branch
      %9 = sbr.rel (0) target = $region5
    $region4: #{tpu_custom_call.1} parent=1 // pred_region
      %11 = vsyncadd [#allocation3], 0
      %s13 = sshll.u32 %s0, 4
      %s14 = int_to_ptr.hbm [resolvable:$true] %s13
      %s15 = sshll.u32 [#allocation2], 4
      %s16 = int_to_ptr.vmem [resolvable:$true] %s15
      %18 = dma.hbm_to_vmem [thread:$0]  %s14, 256, %s16, [#allocation3]
    $region5: #{tpu_custom_call.1} parent=1 // pred_fallthru
      _
    // Predicated region
    $region6: #{tpu_custom_call.1} parent=1 // pred_check
      _
    $region7: #{tpu_custom_call.1} parent=1 // pred_check_branch
      %20 = sbr.rel (0) target = $region9
    $region8: #{tpu_custom_call.1} parent=1 // pred_region
      %22 = dma.done [#allocation3], 256
    $region9: #{tpu_custom_call.1} parent=1 // pred_fallthru
      _
    %v23 = vld [vmem:[#allocation2] sm:$0xff]
    %v24 = vld [vmem:[#allocation2 + $0x8] sm:$0xff]
    %v25 = vadd.f32 %v23, %v24
    %26 = vadd.xlane.f32.xlu0 %v25
    %v27 = vpop.xlane.xlu0 %26
    %v28 = vmul.f32 %v27, 0.00390625
    %29 = vxpose.xlu0.b32.start [1/16] %v28, 128
    %30 = vxpose.xlu0.b32.cont [2/16] 0.0, 128
    %31 = vxpose.xlu0.b32.cont [3/16] 0.0, 128
    %32 = vxpose.xlu0.b32.cont [4/16] 0.0, 128
    %33 = vxpose.xlu0.b32.cont [5/16] 0.0, 128
    %34 = vxpose.xlu0.b32.cont [6/16] 0.0, 128
    %35 = vxpose.xlu0.b32.cont [7/16] 0.0, 128
    %36 = vxpose.xlu0.b32.cont [8/16] 0.0, 128
    %37 = vxpose.xlu0.b32.cont [9/16] 0.0, 128
    %38 = vxpose.xlu0.b32.cont [10/16] 0.0, 128
    %39 = vxpose.xlu0.b32.cont [11/16] 0.0, 128
    %40 = vxpose.xlu0.b32.cont [12/16] 0.0, 128
    %41 = vxpose.xlu0.b32.cont [13/16] 0.0, 128
    %42 = vxpose.xlu0.b32.cont [14/16] 0.0, 128
    %43 = vxpose.xlu0.b32.cont [15/16] 0.0, 128
    %44 = vxpose.xlu0.b32.end [16/16] 0.0, 128
    %v45 = vpop.trf.xlu0
    %v46 = vpop.trf.xlu0
    %v47 = vpop.trf.xlu0
    %v48 = vpop.trf.xlu0
    %v49 = vpop.trf.xlu0
    %v50 = vpop.trf.xlu0
    %v51 = vpop.trf.xlu0
    %v52 = vpop.trf.xlu0
    %v53 = vpop.trf.xlu0
    %v54 = vpop.trf.xlu0
    %v55 = vpop.trf.xlu0
    %v56 = vpop.trf.xlu0
    %v57 = vpop.trf.xlu0
    %v58 = vpop.trf.xlu0
    %v59 = vpop.trf.xlu0
    %v60 = vpop.trf.xlu0
    %vm61 = vcmask 57344
    %62 = vst.msk [vmem:[#allocation5] sm:$0x1] %vm61, %v45
    // Predicated region
    $region10: #{tpu_custom_call.1} parent=1 // pred_check
      _
    $region11: #{tpu_custom_call.1} parent=1 // pred_check_branch
      %64 = sbr.rel (0) target = $region13
    $region12: #{tpu_custom_call.1} parent=1 // pred_region
      %66 = vsyncadd [#allocation4], 0
      %s68 = sshll.u32 [#allocation5], 4
      %s69 = int_to_ptr.vmem [resolvable:$true] %s68
      %s70 = sshll.u32 %s1, 4
      %s71 = int_to_ptr.hbm [resolvable:$true] %s70
      %73 = dma.vmem_to_hbm [thread:$0]  %s69, 16, %s71, [#allocation4]
    $region13: #{tpu_custom_call.1} parent=1 // pred_fallthru
      _
    // Predicated region
    $region14: #{tpu_custom_call.1} parent=1 // pred_check
      _
    $region15: #{tpu_custom_call.1} parent=1 // pred_check_branch
      %75 = sbr.rel (0) target = $region17
    $region16: #{tpu_custom_call.1} parent=1 // pred_region
      %77 = dma.done [#allocation4], 16
    $region17: #{tpu_custom_call.1} parent=1 // pred_fallthru
      _
    %78 = vsyncpa [#allocation3], 1
    %79 = vsyncpa [#allocation4], 1

</llo_original>
